<compile_context>
chip_gen: v6e
topology: v6e:2x2x1
jax: 0.10.0
libtpu: 0.0.40
codegen_flags: <defaults>
</compile_context>

<pallas_src>
import jax
import jax.numpy as jnp
from jax.experimental import pallas as pl
from jax.experimental.pallas import tpu as pltpu


def _dense_vpu(h, w, b):
    """h: [in, TB]  w: [out, in]  b: [out, 1]  ->  [out, TB].

    Unrolled broadcast-FMA over the (<=8) input features; avoids the
    serialized tiny-MXU vmatmul->vpop chain of 4 back-to-back dots.
    """
    acc = b + w[:, 0:1] * h[0:1, :]
    for i in range(1, w.shape[1]):
        acc = acc + w[:, i:i + 1] * h[i:i + 1, :]
    return acc


def mlp_kernel(x_ref,
               w1_ref, b1_ref,
               w2_ref, b2_ref,
               w3_ref, b3_ref,
               w4_ref, b4_ref,
               o_ref):
    # Activations are [features, batch_tile]: batch on the lane axis keeps
    # every vreg fully populated and makes the final store lane-dense.
    h = x_ref[...]                                                    # [x_size, TB]
    h = jnp.maximum(_dense_vpu(h, w1_ref[...], b1_ref[...]), 0.0)     # ReLU
    h = jnp.maximum(_dense_vpu(h, w2_ref[...], b2_ref[...]), 0.0)     # ReLU
    h = jnp.maximum(_dense_vpu(h, w3_ref[...], b3_ref[...]), 0.0)     # ReLU
    o_ref[...] = jnp.tanh(_dense_vpu(h, w4_ref[...], b4_ref[...]))    # Tanh (EUP)


def dnn_forward(x, params, *, tile_batch=512):
    """x: [batch, x_size] (torch convention). params: [(W,b)] with W [out,in], b [out,1]."""
    batch, x_size = x.shape
    out_dim = params[-1][0].shape[0]

    # Batch tile must be a multiple of 128 lanes for partial-block legality.
    tile_batch = max(128, (tile_batch // 128) * 128)
    padded = pl.cdiv(batch, tile_batch) * tile_batch

    # Transpose so batch is the minor (lane) axis; pad to a whole number of tiles.
    x_t = jnp.pad(x.T.astype(jnp.float32), ((0, 0), (0, padded - batch)))

    flat_args = [x_t]
    for w, b in params:
        flat_args.extend([w, b])

    in_specs = [pl.BlockSpec((x_size, tile_batch), lambda i: (0, i))]
    for w, b in params:
        # Tiny weights/biases: whole-array blocks, constant index -> resident
        # in VMEM across all grid steps (no re-DMA per tile).
        in_specs.append(pl.BlockSpec(w.shape, lambda i: (0, 0)))
        in_specs.append(pl.BlockSpec(b.shape, lambda i: (0, 0)))

    param_bytes = sum(int(a.size) * a.dtype.itemsize
                      for w, b in params for a in (w, b))
    flops = 2 * padded * sum(int(w.shape[0]) * int(w.shape[1]) for w, _ in params)
    cost = pl.CostEstimate(
        flops=int(flops),
        transcendentals=int(padded),                               # one tanh per row
        bytes_accessed=int(4 * padded * (x_size + out_dim) + param_bytes),
    )

    out_t = pl.pallas_call(
        mlp_kernel,
        out_shape=jax.ShapeDtypeStruct((out_dim, padded), jnp.float32),
        grid=(padded // tile_batch,),
        in_specs=in_specs,
        out_specs=pl.BlockSpec((out_dim, tile_batch), lambda i: (0, i)),
        compiler_params=pltpu.CompilerParams(
            dimension_semantics=("parallel",),    # batch tiles shard across TCs on v7x
        ),
        cost_estimate=cost,
    )(*flat_args)

    return out_t[:, :batch].T                                      # back to [batch, out_dim]


def init_params(key, x_size=2, hidden_list=(8, 8, 8), out_dim=1):
    """torch.nn.Linear default init: U(-1/sqrt(fan_in), 1/sqrt(fan_in)); W stored [out, in]."""
    dims = [x_size] + list(hidden_list) + [out_dim]
    params = []
    for i in range(len(dims) - 1):
        fan_in, fan_out = dims[i], dims[i + 1]
        key, kw, kb = jax.random.split(key, 3)
        bound = 1.0 / jnp.sqrt(jnp.float32(fan_in))
        w = jax.random.uniform(kw, (fan_out, fan_in), jnp.float32, -bound, bound)
        b = jax.random.uniform(kb, (fan_out, 1), jnp.float32, -bound, bound)
        params.append((w, b))
    return params


def reference_forward(x, params):
    """Pure-JAX reference in the natural [batch, features] layout."""
    h = x
    for i, (w, b) in enumerate(params):
        h = h @ w.T + b.T
        if i < len(params) - 1:
            h = jnp.maximum(h, 0.0)
    return jnp.tanh(h)


if __name__ == "__main__":
    key = jax.random.PRNGKey(0)
    key, kx = jax.random.split(key)

    batch, x_size = 8, 2
    x = jax.random.normal(kx, (batch, x_size), jnp.float32)

    params = init_params(key, x_size=x_size, hidden_list=(8, 8, 8), out_dim=1)

    out = dnn_forward(x, params)
    out = jax.block_until_ready(out)

    ref = reference_forward(x, params)
    assert out.shape == (batch, 1), out.shape
    assert jnp.allclose(out, ref, atol=1e-5, rtol=1e-5), (out, ref)

    print("KERNEL_OK")
</pallas_src>

<mosaic_0001>
module attributes {stable_mosaic.version = 11 : i64} {
  func.func @mlp_kernel(%arg0: i32, %arg1: memref<2x512xf32, #tpu.memory_space<vmem>>, %arg2: memref<8x2xf32, #tpu.memory_space<vmem>>, %arg3: memref<8x1xf32, #tpu.memory_space<vmem>>, %arg4: memref<8x8xf32, #tpu.memory_space<vmem>>, %arg5: memref<8x1xf32, #tpu.memory_space<vmem>>, %arg6: memref<8x8xf32, #tpu.memory_space<vmem>>, %arg7: memref<8x1xf32, #tpu.memory_space<vmem>>, %arg8: memref<1x8xf32, #tpu.memory_space<vmem>>, %arg9: memref<1x1xf32, #tpu.memory_space<vmem>>, %arg10: memref<1x512xf32, #tpu.memory_space<vmem>>) attributes {dimension_semantics = [#tpu.dimension_semantics<parallel>], iteration_bounds = array<i64: 1>, scalar_prefetch = 0 : i64, scratch_operands = 0 : i64, tpu.core_type = #tpu.core_type<tc>, window_params = [{transform_indices = @transform_0, window_bounds = array<i64: 2, 512>}, {pipeline_mode = #tpu.pipeline_mode<synchronous>, transform_indices = @transform_1, window_bounds = array<i64: 8, 2>}, {pipeline_mode = #tpu.pipeline_mode<synchronous>, transform_indices = @transform_2, window_bounds = array<i64: 8, 1>}, {pipeline_mode = #tpu.pipeline_mode<synchronous>, transform_indices = @transform_3, window_bounds = array<i64: 8, 8>}, {pipeline_mode = #tpu.pipeline_mode<synchronous>, transform_indices = @transform_4, window_bounds = array<i64: 8, 1>}, {pipeline_mode = #tpu.pipeline_mode<synchronous>, transform_indices = @transform_5, window_bounds = array<i64: 8, 8>}, {pipeline_mode = #tpu.pipeline_mode<synchronous>, transform_indices = @transform_6, window_bounds = array<i64: 8, 1>}, {pipeline_mode = #tpu.pipeline_mode<synchronous>, transform_indices = @transform_7, window_bounds = array<i64: 1, 8>}, {pipeline_mode = #tpu.pipeline_mode<synchronous>, transform_indices = @transform_8, window_bounds = array<i64: 1, 1>}, {transform_indices = @transform_9, window_bounds = array<i64: 1, 512>}]} {
    %c0 = arith.constant 0 : index
    %c0_0 = arith.constant 0 : index
    %0 = vector.load %arg1[%c0, %c0_0] : memref<2x512xf32, #tpu.memory_space<vmem>>, vector<2x512xf32>
    %c0_1 = arith.constant 0 : index
    %c0_2 = arith.constant 0 : index
    %1 = vector.load %arg2[%c0_1, %c0_2] : memref<8x2xf32, #tpu.memory_space<vmem>>, vector<8x2xf32>
    %c0_3 = arith.constant 0 : index
    %c0_4 = arith.constant 0 : index
    %2 = vector.load %arg3[%c0_3, %c0_4] : memref<8x1xf32, #tpu.memory_space<vmem>>, vector<8x1xf32>
    %3 = vector.extract_strided_slice %1 {offsets = [0, 0], sizes = [8, 1], strides = [1, 1]} : vector<8x2xf32> to vector<8x1xf32>
    %4 = vector.extract_strided_slice %0 {offsets = [0, 0], sizes = [1, 512], strides = [1, 1]} : vector<2x512xf32> to vector<1x512xf32>
    %5 = vector.broadcast %3 : vector<8x1xf32> to vector<8x512xf32>
    %6 = vector.broadcast %4 : vector<1x512xf32> to vector<8x512xf32>
    %7 = arith.mulf %5, %6 : vector<8x512xf32>
    %8 = vector.broadcast %2 : vector<8x1xf32> to vector<8x512xf32>
    %9 = arith.addf %8, %7 : vector<8x512xf32>
    %10 = vector.extract_strided_slice %1 {offsets = [0, 1], sizes = [8, 1], strides = [1, 1]} : vector<8x2xf32> to vector<8x1xf32>
    %11 = vector.extract_strided_slice %0 {offsets = [1, 0], sizes = [1, 512], strides = [1, 1]} : vector<2x512xf32> to vector<1x512xf32>
    %12 = vector.broadcast %10 : vector<8x1xf32> to vector<8x512xf32>
    %13 = vector.broadcast %11 : vector<1x512xf32> to vector<8x512xf32>
    %14 = arith.mulf %12, %13 : vector<8x512xf32>
    %15 = arith.addf %9, %14 : vector<8x512xf32>
    %cst = arith.constant 0.000000e+00 : f32
    %16 = vector.broadcast %cst : f32 to vector<8x512xf32>
    %17 = arith.maximumf %15, %16 : vector<8x512xf32>
    %c0_5 = arith.constant 0 : index
    %c0_6 = arith.constant 0 : index
    %18 = vector.load %arg4[%c0_5, %c0_6] : memref<8x8xf32, #tpu.memory_space<vmem>>, vector<8x8xf32>
    %c0_7 = arith.constant 0 : index
    %c0_8 = arith.constant 0 : index
    %19 = vector.load %arg5[%c0_7, %c0_8] : memref<8x1xf32, #tpu.memory_space<vmem>>, vector<8x1xf32>
    %20 = vector.extract_strided_slice %18 {offsets = [0, 0], sizes = [8, 1], strides = [1, 1]} : vector<8x8xf32> to vector<8x1xf32>
    %21 = vector.extract_strided_slice %17 {offsets = [0, 0], sizes = [1, 512], strides = [1, 1]} : vector<8x512xf32> to vector<1x512xf32>
    %22 = vector.broadcast %20 : vector<8x1xf32> to vector<8x512xf32>
    %23 = vector.broadcast %21 : vector<1x512xf32> to vector<8x512xf32>
    %24 = arith.mulf %22, %23 : vector<8x512xf32>
    %25 = vector.broadcast %19 : vector<8x1xf32> to vector<8x512xf32>
    %26 = arith.addf %25, %24 : vector<8x512xf32>
    %27 = vector.extract_strided_slice %18 {offsets = [0, 1], sizes = [8, 1], strides = [1, 1]} : vector<8x8xf32> to vector<8x1xf32>
    %28 = vector.extract_strided_slice %17 {offsets = [1, 0], sizes = [1, 512], strides = [1, 1]} : vector<8x512xf32> to vector<1x512xf32>
    %29 = vector.broadcast %27 : vector<8x1xf32> to vector<8x512xf32>
    %30 = vector.broadcast %28 : vector<1x512xf32> to vector<8x512xf32>
    %31 = arith.mulf %29, %30 : vector<8x512xf32>
    %32 = arith.addf %26, %31 : vector<8x512xf32>
    %33 = vector.extract_strided_slice %18 {offsets = [0, 2], sizes = [8, 1], strides = [1, 1]} : vector<8x8xf32> to vector<8x1xf32>
    %34 = vector.extract_strided_slice %17 {offsets = [2, 0], sizes = [1, 512], strides = [1, 1]} : vector<8x512xf32> to vector<1x512xf32>
    %35 = vector.broadcast %33 : vector<8x1xf32> to vector<8x512xf32>
    %36 = vector.broadcast %34 : vector<1x512xf32> to vector<8x512xf32>
    %37 = arith.mulf %35, %36 : vector<8x512xf32>
    %38 = arith.addf %32, %37 : vector<8x512xf32>
    %39 = vector.extract_strided_slice %18 {offsets = [0, 3], sizes = [8, 1], strides = [1, 1]} : vector<8x8xf32> to vector<8x1xf32>
    %40 = vector.extract_strided_slice %17 {offsets = [3, 0], sizes = [1, 512], strides = [1, 1]} : vector<8x512xf32> to vector<1x512xf32>
    %41 = vector.broadcast %39 : vector<8x1xf32> to vector<8x512xf32>
    %42 = vector.broadcast %40 : vector<1x512xf32> to vector<8x512xf32>
    %43 = arith.mulf %41, %42 : vector<8x512xf32>
    %44 = arith.addf %38, %43 : vector<8x512xf32>
    %45 = vector.extract_strided_slice %18 {offsets = [0, 4], sizes = [8, 1], strides = [1, 1]} : vector<8x8xf32> to vector<8x1xf32>
    %46 = vector.extract_strided_slice %17 {offsets = [4, 0], sizes = [1, 512], strides = [1, 1]} : vector<8x512xf32> to vector<1x512xf32>
    %47 = vector.broadcast %45 : vector<8x1xf32> to vector<8x512xf32>
    %48 = vector.broadcast %46 : vector<1x512xf32> to vector<8x512xf32>
    %49 = arith.mulf %47, %48 : vector<8x512xf32>
    %50 = arith.addf %44, %49 : vector<8x512xf32>
    %51 = vector.extract_strided_slice %18 {offsets = [0, 5], sizes = [8, 1], strides = [1, 1]} : vector<8x8xf32> to vector<8x1xf32>
    %52 = vector.extract_strided_slice %17 {offsets = [5, 0], sizes = [1, 512], strides = [1, 1]} : vector<8x512xf32> to vector<1x512xf32>
    %53 = vector.broadcast %51 : vector<8x1xf32> to vector<8x512xf32>
    %54 = vector.broadcast %52 : vector<1x512xf32> to vector<8x512xf32>
    %55 = arith.mulf %53, %54 : vector<8x512xf32>
    %56 = arith.addf %50, %55 : vector<8x512xf32>
    %57 = vector.extract_strided_slice %18 {offsets = [0, 6], sizes = [8, 1], strides = [1, 1]} : vector<8x8xf32> to vector<8x1xf32>
    %58 = vector.extract_strided_slice %17 {offsets = [6, 0], sizes = [1, 512], strides = [1, 1]} : vector<8x512xf32> to vector<1x512xf32>
    %59 = vector.broadcast %57 : vector<8x1xf32> to vector<8x512xf32>
    %60 = vector.broadcast %58 : vector<1x512xf32> to vector<8x512xf32>
    %61 = arith.mulf %59, %60 : vector<8x512xf32>
    %62 = arith.addf %56, %61 : vector<8x512xf32>
    %63 = vector.extract_strided_slice %18 {offsets = [0, 7], sizes = [8, 1], strides = [1, 1]} : vector<8x8xf32> to vector<8x1xf32>
    %64 = vector.extract_strided_slice %17 {offsets = [7, 0], sizes = [1, 512], strides = [1, 1]} : vector<8x512xf32> to vector<1x512xf32>
    %65 = vector.broadcast %63 : vector<8x1xf32> to vector<8x512xf32>
    %66 = vector.broadcast %64 : vector<1x512xf32> to vector<8x512xf32>
    %67 = arith.mulf %65, %66 : vector<8x512xf32>
    %68 = arith.addf %62, %67 : vector<8x512xf32>
    %cst_9 = arith.constant 0.000000e+00 : f32
    %69 = vector.broadcast %cst_9 : f32 to vector<8x512xf32>
    %70 = arith.maximumf %68, %69 : vector<8x512xf32>
    %c0_10 = arith.constant 0 : index
    %c0_11 = arith.constant 0 : index
    %71 = vector.load %arg6[%c0_10, %c0_11] : memref<8x8xf32, #tpu.memory_space<vmem>>, vector<8x8xf32>
    %c0_12 = arith.constant 0 : index
    %c0_13 = arith.constant 0 : index
    %72 = vector.load %arg7[%c0_12, %c0_13] : memref<8x1xf32, #tpu.memory_space<vmem>>, vector<8x1xf32>
    %73 = vector.extract_strided_slice %71 {offsets = [0, 0], sizes = [8, 1], strides = [1, 1]} : vector<8x8xf32> to vector<8x1xf32>
    %74 = vector.extract_strided_slice %70 {offsets = [0, 0], sizes = [1, 512], strides = [1, 1]} : vector<8x512xf32> to vector<1x512xf32>
    %75 = vector.broadcast %73 : vector<8x1xf32> to vector<8x512xf32>
    %76 = vector.broadcast %74 : vector<1x512xf32> to vector<8x512xf32>
    %77 = arith.mulf %75, %76 : vector<8x512xf32>
    %78 = vector.broadcast %72 : vector<8x1xf32> to vector<8x512xf32>
    %79 = arith.addf %78, %77 : vector<8x512xf32>
    %80 = vector.extract_strided_slice %71 {offsets = [0, 1], sizes = [8, 1], strides = [1, 1]} : vector<8x8xf32> to vector<8x1xf32>
    %81 = vector.extract_strided_slice %70 {offsets = [1, 0], sizes = [1, 512], strides = [1, 1]} : vector<8x512xf32> to vector<1x512xf32>
    %82 = vector.broadcast %80 : vector<8x1xf32> to vector<8x512xf32>
    %83 = vector.broadcast %81 : vector<1x512xf32> to vector<8x512xf32>
    %84 = arith.mulf %82, %83 : vector<8x512xf32>
    %85 = arith.addf %79, %84 : vector<8x512xf32>
    %86 = vector.extract_strided_slice %71 {offsets = [0, 2], sizes = [8, 1], strides = [1, 1]} : vector<8x8xf32> to vector<8x1xf32>
    %87 = vector.extract_strided_slice %70 {offsets = [2, 0], sizes = [1, 512], strides = [1, 1]} : vector<8x512xf32> to vector<1x512xf32>
    %88 = vector.broadcast %86 : vector<8x1xf32> to vector<8x512xf32>
    %89 = vector.broadcast %87 : vector<1x512xf32> to vector<8x512xf32>
    %90 = arith.mulf %88, %89 : vector<8x512xf32>
    %91 = arith.addf %85, %90 : vector<8x512xf32>
    %92 = vector.extract_strided_slice %71 {offsets = [0, 3], sizes = [8, 1], strides = [1, 1]} : vector<8x8xf32> to vector<8x1xf32>
    %93 = vector.extract_strided_slice %70 {offsets = [3, 0], sizes = [1, 512], strides = [1, 1]} : vector<8x512xf32> to vector<1x512xf32>
    %94 = vector.broadcast %92 : vector<8x1xf32> to vector<8x512xf32>
    %95 = vector.broadcast %93 : vector<1x512xf32> to vector<8x512xf32>
    %96 = arith.mulf %94, %95 : vector<8x512xf32>
    %97 = arith.addf %91, %96 : vector<8x512xf32>
    %98 = vector.extract_strided_slice %71 {offsets = [0, 4], sizes = [8, 1], strides = [1, 1]} : vector<8x8xf32> to vector<8x1xf32>
    %99 = vector.extract_strided_slice %70 {offsets = [4, 0], sizes = [1, 512], strides = [1, 1]} : vector<8x512xf32> to vector<1x512xf32>
    %100 = vector.broadcast %98 : vector<8x1xf32> to vector<8x512xf32>
    %101 = vector.broadcast %99 : vector<1x512xf32> to vector<8x512xf32>
    %102 = arith.mulf %100, %101 : vector<8x512xf32>
    %103 = arith.addf %97, %102 : vector<8x512xf32>
    %104 = vector.extract_strided_slice %71 {offsets = [0, 5], sizes = [8, 1], strides = [1, 1]} : vector<8x8xf32> to vector<8x1xf32>
    %105 = vector.extract_strided_slice %70 {offsets = [5, 0], sizes = [1, 512], strides = [1, 1]} : vector<8x512xf32> to vector<1x512xf32>
    %106 = vector.broadcast %104 : vector<8x1xf32> to vector<8x512xf32>
    %107 = vector.broadcast %105 : vector<1x512xf32> to vector<8x512xf32>
    %108 = arith.mulf %106, %107 : vector<8x512xf32>
    %109 = arith.addf %103, %108 : vector<8x512xf32>
    %110 = vector.extract_strided_slice %71 {offsets = [0, 6], sizes = [8, 1], strides = [1, 1]} : vector<8x8xf32> to vector<8x1xf32>
    %111 = vector.extract_strided_slice %70 {offsets = [6, 0], sizes = [1, 512], strides = [1, 1]} : vector<8x512xf32> to vector<1x512xf32>
    %112 = vector.broadcast %110 : vector<8x1xf32> to vector<8x512xf32>
    %113 = vector.broadcast %111 : vector<1x512xf32> to vector<8x512xf32>
    %114 = arith.mulf %112, %113 : vector<8x512xf32>
    %115 = arith.addf %109, %114 : vector<8x512xf32>
    %116 = vector.extract_strided_slice %71 {offsets = [0, 7], sizes = [8, 1], strides = [1, 1]} : vector<8x8xf32> to vector<8x1xf32>
    %117 = vector.extract_strided_slice %70 {offsets = [7, 0], sizes = [1, 512], strides = [1, 1]} : vector<8x512xf32> to vector<1x512xf32>
    %118 = vector.broadcast %116 : vector<8x1xf32> to vector<8x512xf32>
    %119 = vector.broadcast %117 : vector<1x512xf32> to vector<8x512xf32>
    %120 = arith.mulf %118, %119 : vector<8x512xf32>
    %121 = arith.addf %115, %120 : vector<8x512xf32>
    %cst_14 = arith.constant 0.000000e+00 : f32
    %122 = vector.broadcast %cst_14 : f32 to vector<8x512xf32>
    %123 = arith.maximumf %121, %122 : vector<8x512xf32>
    %c0_15 = arith.constant 0 : index
    %c0_16 = arith.constant 0 : index
    %124 = vector.load %arg8[%c0_15, %c0_16] : memref<1x8xf32, #tpu.memory_space<vmem>>, vector<1x8xf32>
    %c0_17 = arith.constant 0 : index
    %c0_18 = arith.constant 0 : index
    %125 = vector.load %arg9[%c0_17, %c0_18] : memref<1x1xf32, #tpu.memory_space<vmem>>, vector<1x1xf32>
    %126 = vector.extract_strided_slice %124 {offsets = [0, 0], sizes = [1, 1], strides = [1, 1]} : vector<1x8xf32> to vector<1x1xf32>
    %127 = vector.extract_strided_slice %123 {offsets = [0, 0], sizes = [1, 512], strides = [1, 1]} : vector<8x512xf32> to vector<1x512xf32>
    %128 = vector.broadcast %126 : vector<1x1xf32> to vector<1x512xf32>
    %129 = arith.mulf %128, %127 : vector<1x512xf32>
    %130 = vector.broadcast %125 : vector<1x1xf32> to vector<1x512xf32>
    %131 = arith.addf %130, %129 : vector<1x512xf32>
    %132 = vector.extract_strided_slice %124 {offsets = [0, 1], sizes = [1, 1], strides = [1, 1]} : vector<1x8xf32> to vector<1x1xf32>
    %133 = vector.extract_strided_slice %123 {offsets = [1, 0], sizes = [1, 512], strides = [1, 1]} : vector<8x512xf32> to vector<1x512xf32>
    %134 = vector.broadcast %132 : vector<1x1xf32> to vector<1x512xf32>
    %135 = arith.mulf %134, %133 : vector<1x512xf32>
    %136 = arith.addf %131, %135 : vector<1x512xf32>
    %137 = vector.extract_strided_slice %124 {offsets = [0, 2], sizes = [1, 1], strides = [1, 1]} : vector<1x8xf32> to vector<1x1xf32>
    %138 = vector.extract_strided_slice %123 {offsets = [2, 0], sizes = [1, 512], strides = [1, 1]} : vector<8x512xf32> to vector<1x512xf32>
    %139 = vector.broadcast %137 : vector<1x1xf32> to vector<1x512xf32>
    %140 = arith.mulf %139, %138 : vector<1x512xf32>
    %141 = arith.addf %136, %140 : vector<1x512xf32>
    %142 = vector.extract_strided_slice %124 {offsets = [0, 3], sizes = [1, 1], strides = [1, 1]} : vector<1x8xf32> to vector<1x1xf32>
    %143 = vector.extract_strided_slice %123 {offsets = [3, 0], sizes = [1, 512], strides = [1, 1]} : vector<8x512xf32> to vector<1x512xf32>
    %144 = vector.broadcast %142 : vector<1x1xf32> to vector<1x512xf32>
    %145 = arith.mulf %144, %143 : vector<1x512xf32>
    %146 = arith.addf %141, %145 : vector<1x512xf32>
    %147 = vector.extract_strided_slice %124 {offsets = [0, 4], sizes = [1, 1], strides = [1, 1]} : vector<1x8xf32> to vector<1x1xf32>
    %148 = vector.extract_strided_slice %123 {offsets = [4, 0], sizes = [1, 512], strides = [1, 1]} : vector<8x512xf32> to vector<1x512xf32>
    %149 = vector.broadcast %147 : vector<1x1xf32> to vector<1x512xf32>
    %150 = arith.mulf %149, %148 : vector<1x512xf32>
    %151 = arith.addf %146, %150 : vector<1x512xf32>
    %152 = vector.extract_strided_slice %124 {offsets = [0, 5], sizes = [1, 1], strides = [1, 1]} : vector<1x8xf32> to vector<1x1xf32>
    %153 = vector.extract_strided_slice %123 {offsets = [5, 0], sizes = [1, 512], strides = [1, 1]} : vector<8x512xf32> to vector<1x512xf32>
    %154 = vector.broadcast %152 : vector<1x1xf32> to vector<1x512xf32>
    %155 = arith.mulf %154, %153 : vector<1x512xf32>
    %156 = arith.addf %151, %155 : vector<1x512xf32>
    %157 = vector.extract_strided_slice %124 {offsets = [0, 6], sizes = [1, 1], strides = [1, 1]} : vector<1x8xf32> to vector<1x1xf32>
    %158 = vector.extract_strided_slice %123 {offsets = [6, 0], sizes = [1, 512], strides = [1, 1]} : vector<8x512xf32> to vector<1x512xf32>
    %159 = vector.broadcast %157 : vector<1x1xf32> to vector<1x512xf32>
    %160 = arith.mulf %159, %158 : vector<1x512xf32>
    %161 = arith.addf %156, %160 : vector<1x512xf32>
    %162 = vector.extract_strided_slice %124 {offsets = [0, 7], sizes = [1, 1], strides = [1, 1]} : vector<1x8xf32> to vector<1x1xf32>
    %163 = vector.extract_strided_slice %123 {offsets = [7, 0], sizes = [1, 512], strides = [1, 1]} : vector<8x512xf32> to vector<1x512xf32>
    %164 = vector.broadcast %162 : vector<1x1xf32> to vector<1x512xf32>
    %165 = arith.mulf %164, %163 : vector<1x512xf32>
    %166 = arith.addf %161, %165 : vector<1x512xf32>
    %167 = math.tanh %166 : vector<1x512xf32>
    %c0_19 = arith.constant 0 : index
    %c0_20 = arith.constant 0 : index
    %168 = vector.load %arg10[%c0_19, %c0_20] : memref<1x512xf32, #tpu.memory_space<vmem>>, vector<1x512xf32>
    tpu.vector_store %arg10[%c0_19, %c0_20], %167 {strides = array<i32>} : memref<1x512xf32, #tpu.memory_space<vmem>>, vector<1x512xf32>,
    return
  }
  func.func @transform_0(%arg0: i32) -> (i32, i32) {
    %c0_i32 = arith.constant 0 : i32
    %c0_i32_0 = arith.constant 0 : i32
    return %c0_i32, %arg0 : i32, i32
  }
  func.func @transform_1(%arg0: i32) -> (i32, i32) {
    %c0_i32 = arith.constant 0 : i32
    %c0_i32_0 = arith.constant 0 : i32
    %c0_i32_1 = arith.constant 0 : i32
    return %c0_i32, %c0_i32_0 : i32, i32
  }
  func.func @transform_2(%arg0: i32) -> (i32, i32) {
    %c0_i32 = arith.constant 0 : i32
    %c0_i32_0 = arith.constant 0 : i32
    %c0_i32_1 = arith.constant 0 : i32
    return %c0_i32, %c0_i32_0 : i32, i32
  }
  func.func @transform_3(%arg0: i32) -> (i32, i32) {
    %c0_i32 = arith.constant 0 : i32
    %c0_i32_0 = arith.constant 0 : i32
    %c0_i32_1 = arith.constant 0 : i32
    return %c0_i32, %c0_i32_0 : i32, i32
  }
  func.func @transform_4(%arg0: i32) -> (i32, i32) {
    %c0_i32 = arith.constant 0 : i32
    %c0_i32_0 = arith.constant 0 : i32
    %c0_i32_1 = arith.constant 0 : i32
    return %c0_i32, %c0_i32_0 : i32, i32
  }
  func.func @transform_5(%arg0: i32) -> (i32, i32) {
    %c0_i32 = arith.constant 0 : i32
    %c0_i32_0 = arith.constant 0 : i32
    %c0_i32_1 = arith.constant 0 : i32
    return %c0_i32, %c0_i32_0 : i32, i32
  }
  func.func @transform_6(%arg0: i32) -> (i32, i32) {
    %c0_i32 = arith.constant 0 : i32
    %c0_i32_0 = arith.constant 0 : i32
    %c0_i32_1 = arith.constant 0 : i32
    return %c0_i32, %c0_i32_0 : i32, i32
  }
  func.func @transform_7(%arg0: i32) -> (i32, i32) {
    %c0_i32 = arith.constant 0 : i32
    %c0_i32_0 = arith.constant 0 : i32
    %c0_i32_1 = arith.constant 0 : i32
    return %c0_i32, %c0_i32_0 : i32, i32
  }
  func.func @transform_8(%arg0: i32) -> (i32, i32) {
    %c0_i32 = arith.constant 0 : i32
    %c0_i32_0 = arith.constant 0 : i32
    %c0_i32_1 = arith.constant 0 : i32
    return %c0_i32, %c0_i32_0 : i32, i32
  }
  func.func @transform_9(%arg0: i32) -> (i32, i32) {
    %c0_i32 = arith.constant 0 : i32
    %c0_i32_0 = arith.constant 0 : i32
    return %c0_i32, %arg0 : i32, i32
  }
}

</mosaic_0001>

<llo_original>
// kernel: tpu_custom_call.1
$region0: #{tpu_custom_call.1}
  #allocation0 [shape = 'u32[]', space=smem, size = 0x4, offset = 0x4, fixed_abs, tag = 'smem constant byte address 0x4 - core index']
  #allocation1 [shape = 'u32[144,128]{1,0:T(1,128)}', space=vmem, size = 0x12000, scoped, tag = 'internal scratch']
  #allocation2 [shape = 'f32[1,1]{1,0:T(1,128)S(1)}', space=vmem, size = 0x200, scoped, tag = 'scoped memory for tpu_custom_call.1']
  %s0 = inlined_call_operand.vmem [shape: f32[2,512], index: 0, kind: input, shape index: {}]
  %s1 = inlined_call_operand.vmem [shape: f32[8,2], index: 1, kind: input, shape index: {}]
  %s2 = inlined_call_operand.vmem [shape: f32[8,1], index: 2, kind: input, shape index: {}]
  %s3 = inlined_call_operand.vmem [shape: f32[8,8], index: 3, kind: input, shape index: {}]
  %s4 = inlined_call_operand.vmem [shape: f32[8,1], index: 4, kind: input, shape index: {}]
  %s5 = inlined_call_operand.vmem [shape: f32[8,8], index: 5, kind: input, shape index: {}]
  %s6 = inlined_call_operand.vmem [shape: f32[8,1], index: 6, kind: input, shape index: {}]
  %s7 = inlined_call_operand.vmem [shape: f32[1,8], index: 7, kind: input, shape index: {}]
  %s8 = inlined_call_operand.<no memory space> [shape: f32[1,1], index: 8, kind: input, shape index: {}]
  %s9 = inlined_call_operand.hbm [shape: f32[1,512], index: 9, kind: output, shape index: {}]
  %s10 = sld [smem:[#allocation0]]
  $region46: #{tpu_custom_call.1} parent=0
    _
  %s12 = ssub.s32 1, %s10
  %s13 = scalar_select 0, %s12, %s10
  %v14 = vstv %s8
  %15 = vst [vmem:[#allocation2] sm:$0x1] %v14
  $region1: #{tpu_custom_call.1} parent=0
    #allocation3 [shape = 'u8[2048]{0}', space=vmem, size = 0x800, scoped, tag = 'output window, operand 0, single buffered']
    #allocation4 [shape = 's32[1]{0}', space=sflag, size = 0x4, scoped, tag = 'scoped memory for tpu_custom_call.1']
    %16 = vsyncpa [#allocation4], 0
    // Predicated region
    $region2: #{tpu_custom_call.1} parent=1 // pred_check
      _
    $region3: #{tpu_custom_call.1} parent=1 // pred_check_branch
      %18 = sbr.rel (0) target = $region5
    $region4: #{tpu_custom_call.1} parent=1 // pred_region
      _
    $region5: #{tpu_custom_call.1} parent=1 // pred_fallthru
      _
    // Predicated region
    $region6: #{tpu_custom_call.1} parent=1 // pred_check
      _
    $region7: #{tpu_custom_call.1} parent=1 // pred_check_branch
      %20 = sbr.rel (0) target = $region9
    $region8: #{tpu_custom_call.1} parent=1 // pred_region
      _
    $region9: #{tpu_custom_call.1} parent=1 // pred_fallthru
      _
    // Predicated region
    $region10: #{tpu_custom_call.1} parent=1 // pred_check
      _
    $region11: #{tpu_custom_call.1} parent=1 // pred_check_branch
      %22 = sbr.rel (0) target = $region13
    $region12: #{tpu_custom_call.1} parent=1 // pred_region
      _
    $region13: #{tpu_custom_call.1} parent=1 // pred_fallthru
      _
    // Predicated region
    $region14: #{tpu_custom_call.1} parent=1 // pred_check
      _
    $region15: #{tpu_custom_call.1} parent=1 // pred_check_branch
      %24 = sbr.rel (0) target = $region17
    $region16: #{tpu_custom_call.1} parent=1 // pred_region
      _
    $region17: #{tpu_custom_call.1} parent=1 // pred_fallthru
      _
    // Predicated region
    $region18: #{tpu_custom_call.1} parent=1 // pred_check
      _
    $region19: #{tpu_custom_call.1} parent=1 // pred_check_branch
      %26 = sbr.rel (0) target = $region21
    $region20: #{tpu_custom_call.1} parent=1 // pred_region
      _
    $region21: #{tpu_custom_call.1} parent=1 // pred_fallthru
      _
    // Predicated region
    $region22: #{tpu_custom_call.1} parent=1 // pred_check
      _
    $region23: #{tpu_custom_call.1} parent=1 // pred_check_branch
      %28 = sbr.rel (0) target = $region25
    $region24: #{tpu_custom_call.1} parent=1 // pred_region
      _
    $region25: #{tpu_custom_call.1} parent=1 // pred_fallthru
      _
    // Predicated region
    $region26: #{tpu_custom_call.1} parent=1 // pred_check
      _
    $region27: #{tpu_custom_call.1} parent=1 // pred_check_branch
      %30 = sbr.rel (0) target = $region29
    $region28: #{tpu_custom_call.1} parent=1 // pred_region
      _
    $region29: #{tpu_custom_call.1} parent=1 // pred_fallthru
      _
    // Predicated region
    $region30: #{tpu_custom_call.1} parent=1 // pred_check
      _
    $region31: #{tpu_custom_call.1} parent=1 // pred_check_branch
      %32 = sbr.rel (0) target = $region33
    $region32: #{tpu_custom_call.1} parent=1 // pred_region
      _
    $region33: #{tpu_custom_call.1} parent=1 // pred_fallthru
      _
    // Predicated region
    $region34: #{tpu_custom_call.1} parent=1 // pred_check
      _
    $region35: #{tpu_custom_call.1} parent=1 // pred_check_branch
      %34 = sbr.rel (0) target = $region37
    $region36: #{tpu_custom_call.1} parent=1 // pred_region
      _
    $region37: #{tpu_custom_call.1} parent=1 // pred_fallthru
      _
    %v35 = vld [vmem:[%s0] sm:$0xff]
    %v36 = vld [vmem:[%s1] sm:$0xff]
    %v37 = vld [vmem:[%s2] sm:$0xff]
    %39 = vset.pattern.permute.xlu0 0
    %40 = vperm.xlu0 %39, %v36
    %v41 = vpop.permute.xlu0 %40
    %v44 = vlaneseq
    %v45 = vshrl.u32 %v44, 7
    %v46 = vsub.s32 0, %v45
    %v47 = vrot.slane %v35, %v46
    %v48 = vlaneseq
    %v49 = vshrl.u32 %v48, 7
    %v50 = vsub.s32 2, %v49
    %v51 = vrot.slane %v35, %v50
    %v52 = vlaneseq
    %v53 = vshrl.u32 %v52, 7
    %v54 = vsub.s32 4, %v53
    %v55 = vrot.slane %v35, %v54
    %v56 = vlaneseq
    %v57 = vshrl.u32 %v56, 7
    %v58 = vsub.s32 6, %v57
    %v59 = vrot.slane %v35, %v58
    %v64 = vlaneseq
    %v65 = vshrl.u32 %v64, 7
    %v66 = vsub.s32 0, %v65
    %v67 = vrot.slane %v47, %v66
    %v68 = vlaneseq
    %v69 = vshrl.u32 %v68, 7
    %v70 = vsub.s32 0, %v69
    %v71 = vrot.slane %v51, %v70
    %v72 = vlaneseq
    %v73 = vshrl.u32 %v72, 7
    %v74 = vsub.s32 0, %v73
    %v75 = vrot.slane %v55, %v74
    %v76 = vlaneseq
    %v77 = vshrl.u32 %v76, 7
    %v78 = vsub.s32 0, %v77
    %v79 = vrot.slane %v59, %v78
    %v80 = vmul.f32 %v41, %v67
    %v81 = vmul.f32 %v41, %v71
    %v82 = vmul.f32 %v41, %v75
    %v83 = vmul.f32 %v41, %v79
    %85 = vset.pattern.permute.xlu0 0
    %86 = vperm.xlu0 %85, %v37
    %v87 = vpop.permute.xlu0 %86
    %v89 = vadd.f32 %v87, %v80
    %v90 = vadd.f32 %v87, %v81
    %v91 = vadd.f32 %v87, %v82
    %v92 = vadd.f32 %v87, %v83
    %93 = vset.pattern.permute.xlu0 1
    %94 = vperm.xlu0 %93, %v36
    %v95 = vpop.permute.xlu0 %94
    %v97 = vlaneseq
    %v98 = vshrl.u32 %v97, 7
    %v99 = vsub.s32 1, %v98
    %v100 = vrot.slane %v35, %v99
    %v101 = vlaneseq
    %v102 = vshrl.u32 %v101, 7
    %v103 = vsub.s32 3, %v102
    %v104 = vrot.slane %v35, %v103
    %v105 = vlaneseq
    %v106 = vshrl.u32 %v105, 7
    %v107 = vsub.s32 5, %v106
    %v108 = vrot.slane %v35, %v107
    %v109 = vlaneseq
    %v110 = vshrl.u32 %v109, 7
    %v111 = vsub.s32 7, %v110
    %v112 = vrot.slane %v35, %v111
    %v117 = vlaneseq
    %v118 = vshrl.u32 %v117, 7
    %v119 = vsub.s32 1, %v118
    %v120 = vrot.slane %v100, %v119
    %v121 = vlaneseq
    %v122 = vshrl.u32 %v121, 7
    %v123 = vsub.s32 1, %v122
    %v124 = vrot.slane %v104, %v123
    %v125 = vlaneseq
    %v126 = vshrl.u32 %v125, 7
    %v127 = vsub.s32 1, %v126
    %v128 = vrot.slane %v108, %v127
    %v129 = vlaneseq
    %v130 = vshrl.u32 %v129, 7
    %v131 = vsub.s32 1, %v130
    %v132 = vrot.slane %v112, %v131
    %v133 = vmul.f32 %v95, %v120
    %v134 = vmul.f32 %v95, %v124
    %v135 = vmul.f32 %v95, %v128
    %v136 = vmul.f32 %v95, %v132
    %v137 = vadd.f32 %v89, %v133
    %v138 = vadd.f32 %v90, %v134
    %v139 = vadd.f32 %v91, %v135
    %v140 = vadd.f32 %v92, %v136
    %v141 = vmax.f32 %v137, 0.0
    %v142 = vmax.f32 %v138, 0.0
    %v143 = vmax.f32 %v139, 0.0
    %v144 = vmax.f32 %v140, 0.0
    %v145 = vld [vmem:[%s3] sm:$0xff]
    %v146 = vld [vmem:[%s4] sm:$0xff]
    %148 = vset.pattern.permute.xlu0 0
    %149 = vperm.xlu0 %148, %v145
    %v150 = vpop.permute.xlu0 %149
    %v152 = vlaneseq
    %v153 = vshrl.u32 %v152, 7
    %v154 = vsub.s32 0, %v153
    %v155 = vrot.slane %v141, %v154
    %v156 = vlaneseq
    %v157 = vshrl.u32 %v156, 7
    %v158 = vsub.s32 0, %v157
    %v159 = vrot.slane %v142, %v158
    %v160 = vlaneseq
    %v161 = vshrl.u32 %v160, 7
    %v162 = vsub.s32 0, %v161
    %v163 = vrot.slane %v143, %v162
    %v164 = vlaneseq
    %v165 = vshrl.u32 %v164, 7
    %v166 = vsub.s32 0, %v165
    %v167 = vrot.slane %v144, %v166
    %v168 = vmul.f32 %v150, %v155
    %v169 = vmul.f32 %v150, %v159
    %v170 = vmul.f32 %v150, %v163
    %v171 = vmul.f32 %v150, %v167
    %173 = vset.pattern.permute.xlu0 0
    %174 = vperm.xlu0 %173, %v146
    %v175 = vpop.permute.xlu0 %174
    %v177 = vadd.f32 %v175, %v168
    %v178 = vadd.f32 %v175, %v169
    %v179 = vadd.f32 %v175, %v170
    %v180 = vadd.f32 %v175, %v171
    %181 = vset.pattern.permute.xlu0 1
    %182 = vperm.xlu0 %181, %v145
    %v183 = vpop.permute.xlu0 %182
    %v185 = vlaneseq
    %v186 = vshrl.u32 %v185, 7
    %v187 = vsub.s32 1, %v186
    %v188 = vrot.slane %v141, %v187
    %v189 = vlaneseq
    %v190 = vshrl.u32 %v189, 7
    %v191 = vsub.s32 1, %v190
    %v192 = vrot.slane %v142, %v191
    %v193 = vlaneseq
    %v194 = vshrl.u32 %v193, 7
    %v195 = vsub.s32 1, %v194
    %v196 = vrot.slane %v143, %v195
    %v197 = vlaneseq
    %v198 = vshrl.u32 %v197, 7
    %v199 = vsub.s32 1, %v198
    %v200 = vrot.slane %v144, %v199
    %v201 = vmul.f32 %v183, %v188
    %v202 = vmul.f32 %v183, %v192
    %v203 = vmul.f32 %v183, %v196
    %v204 = vmul.f32 %v183, %v200
    %v205 = vadd.f32 %v177, %v201
    %v206 = vadd.f32 %v178, %v202
    %v207 = vadd.f32 %v179, %v203
    %v208 = vadd.f32 %v180, %v204
    %209 = vset.pattern.permute.xlu0 2
    %210 = vperm.xlu0 %209, %v145
    %v211 = vpop.permute.xlu0 %210
    %v213 = vlaneseq
    %v214 = vshrl.u32 %v213, 7
    %v215 = vsub.s32 2, %v214
    %v216 = vrot.slane %v141, %v215
    %v217 = vlaneseq
    %v218 = vshrl.u32 %v217, 7
    %v219 = vsub.s32 2, %v218
    %v220 = vrot.slane %v142, %v219
    %v221 = vlaneseq
    %v222 = vshrl.u32 %v221, 7
    %v223 = vsub.s32 2, %v222
    %v224 = vrot.slane %v143, %v223
    %v225 = vlaneseq
    %v226 = vshrl.u32 %v225, 7
    %v227 = vsub.s32 2, %v226
    %v228 = vrot.slane %v144, %v227
    %v229 = vmul.f32 %v211, %v216
    %v230 = vmul.f32 %v211, %v220
    %v231 = vmul.f32 %v211, %v224
    %v232 = vmul.f32 %v211, %v228
    %v233 = vadd.f32 %v205, %v229
    %v234 = vadd.f32 %v206, %v230
    %v235 = vadd.f32 %v207, %v231
    %v236 = vadd.f32 %v208, %v232
    %237 = vset.pattern.permute.xlu0 3
    %238 = vperm.xlu0 %237, %v145
    %v239 = vpop.permute.xlu0 %238
    %v241 = vlaneseq
    %v242 = vshrl.u32 %v241, 7
    %v243 = vsub.s32 3, %v242
    %v244 = vrot.slane %v141, %v243
    %v245 = vlaneseq
    %v246 = vshrl.u32 %v245, 7
    %v247 = vsub.s32 3, %v246
    %v248 = vrot.slane %v142, %v247
    %v249 = vlaneseq
    %v250 = vshrl.u32 %v249, 7
    %v251 = vsub.s32 3, %v250
    %v252 = vrot.slane %v143, %v251
    %v253 = vlaneseq
    %v254 = vshrl.u32 %v253, 7
    %v255 = vsub.s32 3, %v254
    %v256 = vrot.slane %v144, %v255
    %v257 = vmul.f32 %v239, %v244
    %v258 = vmul.f32 %v239, %v248
    %v259 = vmul.f32 %v239, %v252
    %v260 = vmul.f32 %v239, %v256
    %v261 = vadd.f32 %v233, %v257
    %v262 = vadd.f32 %v234, %v258
    %v263 = vadd.f32 %v235, %v259
    %v264 = vadd.f32 %v236, %v260
    %265 = vset.pattern.permute.xlu0 4
    %266 = vperm.xlu0 %265, %v145
    %v267 = vpop.permute.xlu0 %266
    %v269 = vlaneseq
    %v270 = vshrl.u32 %v269, 7
    %v271 = vsub.s32 4, %v270
    %v272 = vrot.slane %v141, %v271
    %v273 = vlaneseq
    %v274 = vshrl.u32 %v273, 7
    %v275 = vsub.s32 4, %v274
    %v276 = vrot.slane %v142, %v275
    %v277 = vlaneseq
    %v278 = vshrl.u32 %v277, 7
    %v279 = vsub.s32 4, %v278
    %v280 = vrot.slane %v143, %v279
    %v281 = vlaneseq
    %v282 = vshrl.u32 %v281, 7
    %v283 = vsub.s32 4, %v282
    %v284 = vrot.slane %v144, %v283
    %v285 = vmul.f32 %v267, %v272
    %v286 = vmul.f32 %v267, %v276
    %v287 = vmul.f32 %v267, %v280
    %v288 = vmul.f32 %v267, %v284
    %v289 = vadd.f32 %v261, %v285
    %v290 = vadd.f32 %v262, %v286
    %v291 = vadd.f32 %v263, %v287
    %v292 = vadd.f32 %v264, %v288
    %293 = vset.pattern.permute.xlu0 5
    %294 = vperm.xlu0 %293, %v145
    %v295 = vpop.permute.xlu0 %294
    %v297 = vlaneseq
    %v298 = vshrl.u32 %v297, 7
    %v299 = vsub.s32 5, %v298
    %v300 = vrot.slane %v141, %v299
    %v301 = vlaneseq
    %v302 = vshrl.u32 %v301, 7
    %v303 = vsub.s32 5, %v302
    %v304 = vrot.slane %v142, %v303
    %v305 = vlaneseq
    %v306 = vshrl.u32 %v305, 7
    %v307 = vsub.s32 5, %v306
    %v308 = vrot.slane %v143, %v307
    %v309 = vlaneseq
    %v310 = vshrl.u32 %v309, 7
    %v311 = vsub.s32 5, %v310
    %v312 = vrot.slane %v144, %v311
    %v313 = vmul.f32 %v295, %v300
    %v314 = vmul.f32 %v295, %v304
    %v315 = vmul.f32 %v295, %v308
    %v316 = vmul.f32 %v295, %v312
    %v317 = vadd.f32 %v289, %v313
    %v318 = vadd.f32 %v290, %v314
    %v319 = vadd.f32 %v291, %v315
    %v320 = vadd.f32 %v292, %v316
    %321 = vset.pattern.permute.xlu0 6
    %322 = vperm.xlu0 %321, %v145
    %v323 = vpop.permute.xlu0 %322
    %v325 = vlaneseq
    %v326 = vshrl.u32 %v325, 7
    %v327 = vsub.s32 6, %v326
    %v328 = vrot.slane %v141, %v327
    %v329 = vlaneseq
    %v330 = vshrl.u32 %v329, 7
    %v331 = vsub.s32 6, %v330
    %v332 = vrot.slane %v142, %v331
    %v333 = vlaneseq
    %v334 = vshrl.u32 %v333, 7
    %v335 = vsub.s32 6, %v334
    %v336 = vrot.slane %v143, %v335
    %v337 = vlaneseq
    %v338 = vshrl.u32 %v337, 7
    %v339 = vsub.s32 6, %v338
    %v340 = vrot.slane %v144, %v339
    %v341 = vmul.f32 %v323, %v328
    %v342 = vmul.f32 %v323, %v332
    %v343 = vmul.f32 %v323, %v336
    %v344 = vmul.f32 %v323, %v340
    %v345 = vadd.f32 %v317, %v341
    %v346 = vadd.f32 %v318, %v342
    %v347 = vadd.f32 %v319, %v343
    %v348 = vadd.f32 %v320, %v344
    %349 = vset.pattern.permute.xlu0 7
    %350 = vperm.xlu0 %349, %v145
    %v351 = vpop.permute.xlu0 %350
    %v353 = vlaneseq
    %v354 = vshrl.u32 %v353, 7
    %v355 = vsub.s32 7, %v354
    %v356 = vrot.slane %v141, %v355
    %v357 = vlaneseq
    %v358 = vshrl.u32 %v357, 7
    %v359 = vsub.s32 7, %v358
    %v360 = vrot.slane %v142, %v359
    %v361 = vlaneseq
    %v362 = vshrl.u32 %v361, 7
    %v363 = vsub.s32 7, %v362
    %v364 = vrot.slane %v143, %v363
    %v365 = vlaneseq
    %v366 = vshrl.u32 %v365, 7
    %v367 = vsub.s32 7, %v366
    %v368 = vrot.slane %v144, %v367
    %v369 = vmul.f32 %v351, %v356
    %v370 = vmul.f32 %v351, %v360
    %v371 = vmul.f32 %v351, %v364
    %v372 = vmul.f32 %v351, %v368
    %v373 = vadd.f32 %v345, %v369
    %v374 = vadd.f32 %v346, %v370
    %v375 = vadd.f32 %v347, %v371
    %v376 = vadd.f32 %v348, %v372
    %v377 = vmax.f32 %v373, 0.0
    %v378 = vmax.f32 %v374, 0.0
    %v379 = vmax.f32 %v375, 0.0
    %v380 = vmax.f32 %v376, 0.0
    %v381 = vld [vmem:[%s5] sm:$0xff]
    %v382 = vld [vmem:[%s6] sm:$0xff]
    %384 = vset.pattern.permute.xlu0 0
    %385 = vperm.xlu0 %384, %v381
    %v386 = vpop.permute.xlu0 %385
    %v388 = vlaneseq
    %v389 = vshrl.u32 %v388, 7
    %v390 = vsub.s32 0, %v389
    %v391 = vrot.slane %v377, %v390
    %v392 = vlaneseq
    %v393 = vshrl.u32 %v392, 7
    %v394 = vsub.s32 0, %v393
    %v395 = vrot.slane %v378, %v394
    %v396 = vlaneseq
    %v397 = vshrl.u32 %v396, 7
    %v398 = vsub.s32 0, %v397
    %v399 = vrot.slane %v379, %v398
    %v400 = vlaneseq
    %v401 = vshrl.u32 %v400, 7
    %v402 = vsub.s32 0, %v401
    %v403 = vrot.slane %v380, %v402
    %v404 = vmul.f32 %v386, %v391
    %v405 = vmul.f32 %v386, %v395
    %v406 = vmul.f32 %v386, %v399
    %v407 = vmul.f32 %v386, %v403
    %409 = vset.pattern.permute.xlu0 0
    %410 = vperm.xlu0 %409, %v382
    %v411 = vpop.permute.xlu0 %410
    %v413 = vadd.f32 %v411, %v404
    %v414 = vadd.f32 %v411, %v405
    %v415 = vadd.f32 %v411, %v406
    %v416 = vadd.f32 %v411, %v407
    %417 = vset.pattern.permute.xlu0 1
    %418 = vperm.xlu0 %417, %v381
    %v419 = vpop.permute.xlu0 %418
    %v421 = vlaneseq
    %v422 = vshrl.u32 %v421, 7
    %v423 = vsub.s32 1, %v422
    %v424 = vrot.slane %v377, %v423
    %v425 = vlaneseq
    %v426 = vshrl.u32 %v425, 7
    %v427 = vsub.s32 1, %v426
    %v428 = vrot.slane %v378, %v427
    %v429 = vlaneseq
    %v430 = vshrl.u32 %v429, 7
    %v431 = vsub.s32 1, %v430
    %v432 = vrot.slane %v379, %v431
    %v433 = vlaneseq
    %v434 = vshrl.u32 %v433, 7
    %v435 = vsub.s32 1, %v434
    %v436 = vrot.slane %v380, %v435
    %v437 = vmul.f32 %v419, %v424
    %v438 = vmul.f32 %v419, %v428
    %v439 = vmul.f32 %v419, %v432
    %v440 = vmul.f32 %v419, %v436
    %v441 = vadd.f32 %v413, %v437
    %v442 = vadd.f32 %v414, %v438
    %v443 = vadd.f32 %v415, %v439
    %v444 = vadd.f32 %v416, %v440
    %445 = vset.pattern.permute.xlu0 2
    %446 = vperm.xlu0 %445, %v381
    %v447 = vpop.permute.xlu0 %446
    %v449 = vlaneseq
    %v450 = vshrl.u32 %v449, 7
    %v451 = vsub.s32 2, %v450
    %v452 = vrot.slane %v377, %v451
    %v453 = vlaneseq
    %v454 = vshrl.u32 %v453, 7
    %v455 = vsub.s32 2, %v454
    %v456 = vrot.slane %v378, %v455
    %v457 = vlaneseq
    %v458 = vshrl.u32 %v457, 7
    %v459 = vsub.s32 2, %v458
    %v460 = vrot.slane %v379, %v459
    %v461 = vlaneseq
    %v462 = vshrl.u32 %v461, 7
    %v463 = vsub.s32 2, %v462
    %v464 = vrot.slane %v380, %v463
    %v465 = vmul.f32 %v447, %v452
    %v466 = vmul.f32 %v447, %v456
    %v467 = vmul.f32 %v447, %v460
    %v468 = vmul.f32 %v447, %v464
    %v469 = vadd.f32 %v441, %v465
    %v470 = vadd.f32 %v442, %v466
    %v471 = vadd.f32 %v443, %v467
    %v472 = vadd.f32 %v444, %v468
    %473 = vset.pattern.permute.xlu0 3
    %474 = vperm.xlu0 %473, %v381
    %v475 = vpop.permute.xlu0 %474
    %v477 = vlaneseq
    %v478 = vshrl.u32 %v477, 7
    %v479 = vsub.s32 3, %v478
    %v480 = vrot.slane %v377, %v479
    %v481 = vlaneseq
    %v482 = vshrl.u32 %v481, 7
    %v483 = vsub.s32 3, %v482
    %v484 = vrot.slane %v378, %v483
    %v485 = vlaneseq
    %v486 = vshrl.u32 %v485, 7
    %v487 = vsub.s32 3, %v486
    %v488 = vrot.slane %v379, %v487
    %v489 = vlaneseq
    %v490 = vshrl.u32 %v489, 7
    %v491 = vsub.s32 3, %v490
    %v492 = vrot.slane %v380, %v491
    %v493 = vmul.f32 %v475, %v480
    %v494 = vmul.f32 %v475, %v484
    %v495 = vmul.f32 %v475, %v488
    %v496 = vmul.f32 %v475, %v492
    %v497 = vadd.f32 %v469, %v493
    %v498 = vadd.f32 %v470, %v494
    %v499 = vadd.f32 %v471, %v495
    %v500 = vadd.f32 %v472, %v496
    %501 = vset.pattern.permute.xlu0 4
    %502 = vperm.xlu0 %501, %v381
    %v503 = vpop.permute.xlu0 %502
    %v505 = vlaneseq
    %v506 = vshrl.u32 %v505, 7
    %v507 = vsub.s32 4, %v506
    %v508 = vrot.slane %v377, %v507
    %v509 = vlaneseq
    %v510 = vshrl.u32 %v509, 7
    %v511 = vsub.s32 4, %v510
    %v512 = vrot.slane %v378, %v511
    %v513 = vlaneseq
    %v514 = vshrl.u32 %v513, 7
    %v515 = vsub.s32 4, %v514
    %v516 = vrot.slane %v379, %v515
    %v517 = vlaneseq
    %v518 = vshrl.u32 %v517, 7
    %v519 = vsub.s32 4, %v518
    %v520 = vrot.slane %v380, %v519
    %v521 = vmul.f32 %v503, %v508
    %v522 = vmul.f32 %v503, %v512
    %v523 = vmul.f32 %v503, %v516
    %v524 = vmul.f32 %v503, %v520
    %v525 = vadd.f32 %v497, %v521
    %v526 = vadd.f32 %v498, %v522
    %v527 = vadd.f32 %v499, %v523
    %v528 = vadd.f32 %v500, %v524
    %529 = vset.pattern.permute.xlu0 5
    %530 = vperm.xlu0 %529, %v381
    %v531 = vpop.permute.xlu0 %530
    %v533 = vlaneseq
    %v534 = vshrl.u32 %v533, 7
    %v535 = vsub.s32 5, %v534
    %v536 = vrot.slane %v377, %v535
    %v537 = vlaneseq
    %v538 = vshrl.u32 %v537, 7
    %v539 = vsub.s32 5, %v538
    %v540 = vrot.slane %v378, %v539
    %v541 = vlaneseq
    %v542 = vshrl.u32 %v541, 7
    %v543 = vsub.s32 5, %v542
    %v544 = vrot.slane %v379, %v543
    %v545 = vlaneseq
    %v546 = vshrl.u32 %v545, 7
    %v547 = vsub.s32 5, %v546
    %v548 = vrot.slane %v380, %v547
    %v549 = vmul.f32 %v531, %v536
    %v550 = vmul.f32 %v531, %v540
    %v551 = vmul.f32 %v531, %v544
    %v552 = vmul.f32 %v531, %v548
    %v553 = vadd.f32 %v525, %v549
    %v554 = vadd.f32 %v526, %v550
    %v555 = vadd.f32 %v527, %v551
    %v556 = vadd.f32 %v528, %v552
    %557 = vset.pattern.permute.xlu0 6
    %558 = vperm.xlu0 %557, %v381
    %v559 = vpop.permute.xlu0 %558
    %v561 = vlaneseq
    %v562 = vshrl.u32 %v561, 7
    %v563 = vsub.s32 6, %v562
    %v564 = vrot.slane %v377, %v563
    %v565 = vlaneseq
    %v566 = vshrl.u32 %v565, 7
    %v567 = vsub.s32 6, %v566
    %v568 = vrot.slane %v378, %v567
    %v569 = vlaneseq
    %v570 = vshrl.u32 %v569, 7
    %v571 = vsub.s32 6, %v570
    %v572 = vrot.slane %v379, %v571
    %v573 = vlaneseq
    %v574 = vshrl.u32 %v573, 7
    %v575 = vsub.s32 6, %v574
    %v576 = vrot.slane %v380, %v575
    %v577 = vmul.f32 %v559, %v564
    %v578 = vmul.f32 %v559, %v568
    %v579 = vmul.f32 %v559, %v572
    %v580 = vmul.f32 %v559, %v576
    %v581 = vadd.f32 %v553, %v577
    %v582 = vadd.f32 %v554, %v578
    %v583 = vadd.f32 %v555, %v579
    %v584 = vadd.f32 %v556, %v580
    %585 = vset.pattern.permute.xlu0 7
    %586 = vperm.xlu0 %585, %v381
    %v587 = vpop.permute.xlu0 %586
    %v589 = vlaneseq
    %v590 = vshrl.u32 %v589, 7
    %v591 = vsub.s32 7, %v590
    %v592 = vrot.slane %v377, %v591
    %v593 = vlaneseq
    %v594 = vshrl.u32 %v593, 7
    %v595 = vsub.s32 7, %v594
    %v596 = vrot.slane %v378, %v595
    %v597 = vlaneseq
    %v598 = vshrl.u32 %v597, 7
    %v599 = vsub.s32 7, %v598
    %v600 = vrot.slane %v379, %v599
    %v601 = vlaneseq
    %v602 = vshrl.u32 %v601, 7
    %v603 = vsub.s32 7, %v602
    %v604 = vrot.slane %v380, %v603
    %v605 = vmul.f32 %v587, %v592
    %v606 = vmul.f32 %v587, %v596
    %v607 = vmul.f32 %v587, %v600
    %v608 = vmul.f32 %v587, %v604
    %v609 = vadd.f32 %v581, %v605
    %v610 = vadd.f32 %v582, %v606
    %v611 = vadd.f32 %v583, %v607
    %v612 = vadd.f32 %v584, %v608
    %v613 = vmax.f32 %v609, 0.0
    %v614 = vmax.f32 %v610, 0.0
    %v615 = vmax.f32 %v611, 0.0
    %v616 = vmax.f32 %v612, 0.0
    %v617 = vld [vmem:[%s7] sm:$0x1]
    %v618 = vld [vmem:[#allocation2] sm:$0x1]
    %620 = vset.pattern.permute.xlu0 0
    %621 = vperm.xlu0 %620, %v617
    %v622 = vpop.permute.xlu0 %621
    %v624 = vlaneseq
    %v625 = vshrl.u32 %v624, 7
    %v626 = vsub.s32 0, %v625
    %v627 = vrot.slane %v622, %v626
    %v628 = vmul.f32 %v627, %v613
    %v629 = vmul.f32 %v627, %v614
    %v630 = vmul.f32 %v627, %v615
    %v631 = vmul.f32 %v627, %v616
    %633 = vset.pattern.permute.xlu0 0
    %634 = vperm.xlu0 %633, %v618
    %v635 = vpop.permute.xlu0 %634
    %v637 = vlaneseq
    %v638 = vshrl.u32 %v637, 7
    %v639 = vsub.s32 0, %v638
    %v640 = vrot.slane %v635, %v639
    %v641 = vadd.f32 %v640, %v628
    %v642 = vadd.f32 %v640, %v629
    %v643 = vadd.f32 %v640, %v630
    %v644 = vadd.f32 %v640, %v631
    %645 = vset.pattern.permute.xlu0 1
    %646 = vperm.xlu0 %645, %v617
    %v647 = vpop.permute.xlu0 %646
    %v649 = vlaneseq
    %v650 = vshrl.u32 %v649, 7
    %v651 = vsub.s32 0, %v650
    %v652 = vrot.slane %v647, %v651
    %v653 = vmul.f32 %v652, %v613
    %v654 = vmul.f32 %v652, %v614
    %v655 = vmul.f32 %v652, %v615
    %v656 = vmul.f32 %v652, %v616
    %v661 = vrot.slane %v653, 1
    %v662 = vrot.slane %v654, 1
    %v663 = vrot.slane %v655, 1
    %v664 = vrot.slane %v656, 1
    %v669 = vadd.f32 %v641, %v661
    %v670 = vadd.f32 %v642, %v662
    %v671 = vadd.f32 %v643, %v663
    %v672 = vadd.f32 %v644, %v664
    %673 = vset.pattern.permute.xlu0 2
    %674 = vperm.xlu0 %673, %v617
    %v675 = vpop.permute.xlu0 %674
    %v677 = vlaneseq
    %v678 = vshrl.u32 %v677, 7
    %v679 = vsub.s32 0, %v678
    %v680 = vrot.slane %v675, %v679
    %v681 = vmul.f32 %v680, %v613
    %v682 = vmul.f32 %v680, %v614
    %v683 = vmul.f32 %v680, %v615
    %v684 = vmul.f32 %v680, %v616
    %v689 = vrot.slane %v681, 2
    %v690 = vrot.slane %v682, 2
    %v691 = vrot.slane %v683, 2
    %v692 = vrot.slane %v684, 2
    %v697 = vadd.f32 %v669, %v689
    %v698 = vadd.f32 %v670, %v690
    %v699 = vadd.f32 %v671, %v691
    %v700 = vadd.f32 %v672, %v692
    %701 = vset.pattern.permute.xlu0 3
    %702 = vperm.xlu0 %701, %v617
    %v703 = vpop.permute.xlu0 %702
    %v705 = vlaneseq
    %v706 = vshrl.u32 %v705, 7
    %v707 = vsub.s32 0, %v706
    %v708 = vrot.slane %v703, %v707
    %v709 = vmul.f32 %v708, %v613
    %v710 = vmul.f32 %v708, %v614
    %v711 = vmul.f32 %v708, %v615
    %v712 = vmul.f32 %v708, %v616
    %v717 = vrot.slane %v709, 3
    %v718 = vrot.slane %v710, 3
    %v719 = vrot.slane %v711, 3
    %v720 = vrot.slane %v712, 3
    %v725 = vadd.f32 %v697, %v717
    %v726 = vadd.f32 %v698, %v718
    %v727 = vadd.f32 %v699, %v719
    %v728 = vadd.f32 %v700, %v720
    %729 = vset.pattern.permute.xlu0 4
    %730 = vperm.xlu0 %729, %v617
    %v731 = vpop.permute.xlu0 %730
    %v733 = vlaneseq
    %v734 = vshrl.u32 %v733, 7
    %v735 = vsub.s32 0, %v734
    %v736 = vrot.slane %v731, %v735
    %v737 = vmul.f32 %v736, %v613
    %v738 = vmul.f32 %v736, %v614
    %v739 = vmul.f32 %v736, %v615
    %v740 = vmul.f32 %v736, %v616
    %v745 = vrot.slane %v737, 4
    %v746 = vrot.slane %v738, 4
    %v747 = vrot.slane %v739, 4
    %v748 = vrot.slane %v740, 4
    %v753 = vadd.f32 %v725, %v745
    %v754 = vadd.f32 %v726, %v746
    %v755 = vadd.f32 %v727, %v747
    %v756 = vadd.f32 %v728, %v748
    %757 = vset.pattern.permute.xlu0 5
    %758 = vperm.xlu0 %757, %v617
    %v759 = vpop.permute.xlu0 %758
    %v761 = vlaneseq
    %v762 = vshrl.u32 %v761, 7
    %v763 = vsub.s32 0, %v762
    %v764 = vrot.slane %v759, %v763
    %v765 = vmul.f32 %v764, %v613
    %v766 = vmul.f32 %v764, %v614
    %v767 = vmul.f32 %v764, %v615
    %v768 = vmul.f32 %v764, %v616
    %v773 = vrot.slane %v765, 5
    %v774 = vrot.slane %v766, 5
    %v775 = vrot.slane %v767, 5
    %v776 = vrot.slane %v768, 5
    %v781 = vadd.f32 %v753, %v773
    %v782 = vadd.f32 %v754, %v774
    %v783 = vadd.f32 %v755, %v775
    %v784 = vadd.f32 %v756, %v776
    %785 = vset.pattern.permute.xlu0 6
    %786 = vperm.xlu0 %785, %v617
    %v787 = vpop.permute.xlu0 %786
    %v789 = vlaneseq
    %v790 = vshrl.u32 %v789, 7
    %v791 = vsub.s32 0, %v790
    %v792 = vrot.slane %v787, %v791
    %v793 = vmul.f32 %v792, %v613
    %v794 = vmul.f32 %v792, %v614
    %v795 = vmul.f32 %v792, %v615
    %v796 = vmul.f32 %v792, %v616
    %v801 = vrot.slane %v793, 6
    %v802 = vrot.slane %v794, 6
    %v803 = vrot.slane %v795, 6
    %v804 = vrot.slane %v796, 6
    %v809 = vadd.f32 %v781, %v801
    %v810 = vadd.f32 %v782, %v802
    %v811 = vadd.f32 %v783, %v803
    %v812 = vadd.f32 %v784, %v804
    %813 = vset.pattern.permute.xlu0 7
    %814 = vperm.xlu0 %813, %v617
    %v815 = vpop.permute.xlu0 %814
    %v817 = vlaneseq
    %v818 = vshrl.u32 %v817, 7
    %v819 = vsub.s32 0, %v818
    %v820 = vrot.slane %v815, %v819
    %v821 = vmul.f32 %v820, %v613
    %v822 = vmul.f32 %v820, %v614
    %v823 = vmul.f32 %v820, %v615
    %v824 = vmul.f32 %v820, %v616
    %v829 = vrot.slane %v821, 7
    %v830 = vrot.slane %v822, 7
    %v831 = vrot.slane %v823, 7
    %v832 = vrot.slane %v824, 7
    %v837 = vadd.f32 %v809, %v829
    %v838 = vadd.f32 %v810, %v830
    %v839 = vadd.f32 %v811, %v831
    %v840 = vadd.f32 %v812, %v832
    %v841 = vtanh.pop %v837
    %v842 = vtanh.pop %v838
    %v843 = vtanh.pop %v839
    %v844 = vtanh.pop %v840
    %v849 = vcombine.low %v841, %v842
    %v850 = vcombine.low %v843, %v844
    %v852 = vunpack.c.l.s4 1966171168
    %v853 = vunpack.c.0.s8 %v852
    %v854 = vlaneseq
    %v855 = vshrl.u32 %v854, 7
    %v856 = vsub.s32 %v853, %v855
    %v857 = vrot.slane %v849, %v856
    %v859 = vunpack.c.l.s4 1966171168
    %v860 = vunpack.c.0.s8 %v859
    %v861 = vlaneseq
    %v862 = vshrl.u32 %v861, 7
    %v863 = vsub.s32 %v860, %v862
    %v864 = vrot.slane %v850, %v863
    %v865 = vcombine.low %v857, %v864
    %v867 = vunpack.c.l.s4 1966171168
    %v868 = vunpack.c.0.s8 %v867
    %v869 = vlaneseq
    %v870 = vshrl.u32 %v869, 7
    %v871 = vsub.s32 %v868, %v870
    %v872 = vrot.slane %v865, %v871
    %v874 = vlaneseq
    %vm875 = vcmp.ge.s32.totalorder %v874, 0
    %vm876 = vcmp.lt.s32.totalorder %v874, 512
    %vm877 = vmand %vm875, %vm876
    %878 = vst.msk [vmem:[#allocation3] sm:$0xf] %vm877, %v872
    // Predicated region
    $region38: #{tpu_custom_call.1} parent=1 // pred_check
      _
    $region39: #{tpu_custom_call.1} parent=1 // pred_check_branch
      %880 = sbr.rel (0) target = $region41
    $region40: #{tpu_custom_call.1} parent=1 // pred_region
      %s882 = ssub.s32 64, 64
      %883 = vsyncadd [#allocation4], %s882
      %s885 = sshll.u32 [#allocation3], 4
      %s886 = int_to_ptr.vmem [resolvable:$true] %s885
      %888 = dma.vmem_to_hbm [thread:$0]  %s886, 64, %s9, [#allocation4]
    $region41: #{tpu_custom_call.1} parent=1 // pred_fallthru
      _
    // Predicated region
    $region42: #{tpu_custom_call.1} parent=1 // pred_check
      _
    $region43: #{tpu_custom_call.1} parent=1 // pred_check_branch
      %890 = sbr.rel (0) target = $region45
    $region44: #{tpu_custom_call.1} parent=1 // pred_region
      %891 = dma.done [#allocation4], 64
    $region45: #{tpu_custom_call.1} parent=1 // pred_fallthru
      _
    %892 = vsyncpa [#allocation4], 1

</llo_original>
